<compile_context>
chip_gen: v6e
topology: v6e:2x2x1
jax: 0.10.0
libtpu: 0.0.40
codegen_flags: <defaults>
</compile_context>

<pallas_src>
import math

import jax
import jax.numpy as jnp
from jax import lax
from jax.experimental import pallas as pl
from jax.experimental.pallas import tpu as pltpu

_LN_EPS = 1e-5          # torch.nn.LayerNorm default
_LANE = 128
_H1, _H2 = 20, 10
_TB_CAP = 8192          # per-step footprint ~6 MiB; amortizes step overhead


def generator_kernel(x_ref,
                     w1_ref, b1_ref, g1_ref, be1_ref,
                     w2_ref, b2_ref, g2_ref, be2_ref,
                     w3_ref, b3_ref,
                     o_ref):
    # x block: [TB, latent] f32, streamed straight from HBM (no wrapper cast).
    x = x_ref[...].astype(jnp.float32)

    # ---- Linear(latent, 20): h[o,b] = sum_l w1[o,l] * x[b,l] -> [20, TB] ----
    # Contracting dims (1,1) == q@k^T pattern: MXU-native, no x-tile transpose.
    h = lax.dot_general(w1_ref[...], x, (((1,), (1,)), ((), ())),
                        preferred_element_type=jnp.float32) + b1_ref[...]
    # LayerNorm(20) over the feature axis (axis 0, feature-major) + affine + ReLU.
    mu = jnp.mean(h, axis=0, keepdims=True)
    var = jnp.mean((h - mu) ** 2, axis=0, keepdims=True)
    h = (h - mu) * lax.rsqrt(var + _LN_EPS)
    h = jnp.maximum(h * g1_ref[...] + be1_ref[...], 0.0)

    # ---- Linear(20, 10) + LayerNorm(10) + ReLU ----
    h = jnp.dot(w2_ref[...], h, preferred_element_type=jnp.float32) + b2_ref[...]
    mu = jnp.mean(h, axis=0, keepdims=True)
    var = jnp.mean((h - mu) ** 2, axis=0, keepdims=True)
    h = (h - mu) * lax.rsqrt(var + _LN_EPS)
    h = jnp.maximum(h * g2_ref[...] + be2_ref[...], 0.0)

    # ---- Linear(10, target) + Sigmoid ----
    h = jnp.dot(w3_ref[...], h, preferred_element_type=jnp.float32) + b3_ref[...]
    # Lane-dense store: block last dim is TB (multiple of 128) -> unmasked vst
    # on full tiles; the ragged last tile (if any) is masked by Pallas.
    o_ref[...] = jax.nn.sigmoid(h)


def _round_up(a, b):
    return ((a + b - 1) // b) * b


def _choose_batch_tile(B):
    """Lane-aligned batch tile, capped high enough to amortize step overhead."""
    tb = _TB_CAP
    # Keep >= 2 grid tiles when there's enough work so v7x's two TensorCores
    # both get a share under dimension_semantics=("parallel",).
    if B >= 2 * _LANE:
        tb = min(tb, _round_up(-(-B // 2), _LANE))
    # Never bigger than the lane-rounded batch; always a multiple of 128.
    tb = min(tb, _round_up(B, _LANE))
    return max((tb // _LANE) * _LANE, _LANE)


def _generator_forward(x, params):
    """x: any shape [B, ...]; flattened to [B, latent_dim] like nn.Flatten."""
    B = x.shape[0]
    latent_dim = params["w1"].shape[1]
    target_dim = params["w3"].shape[0]

    # nn.Flatten + the module's torch.tensor(..., dtype=float32) cast.
    x2d = jnp.reshape(x, (B, -1)).astype(jnp.float32)
    assert x2d.shape[1] == latent_dim

    TB = _choose_batch_tile(B)
    n_tiles = pl.cdiv(B, TB)          # no pad: Pallas clips the last block

    inputs = (
        x2d,
        params["w1"], params["b1"], params["g1"], params["be1"],
        params["w2"], params["b2"], params["g2"], params["be2"],
        params["w3"], params["b3"],
    )

    def resident(shape):
        # Whole-array block, same index every step -> stays VMEM-resident.
        return pl.BlockSpec(shape, lambda i: (0,) * len(shape))

    in_specs = [pl.BlockSpec((TB, latent_dim), lambda i: (i, 0))]
    in_specs += [resident(a.shape) for a in inputs[1:]]
    # Feature-major output: [target_dim, B]; block last dim TB (lane-dense).
    out_spec = pl.BlockSpec((target_dim, TB), lambda i: (0, i))

    weight_bytes = sum(int(a.size) * a.dtype.itemsize for a in inputs[1:])
    cost = pl.CostEstimate(
        flops=2 * B * (latent_dim * _H1 + _H1 * _H2 + _H2 * target_dim),
        transcendentals=B * (target_dim + 2),       # sigmoid + 2x rsqrt
        bytes_accessed=B * (latent_dim + target_dim) * 4 + weight_bytes,
    )

    out_t = pl.pallas_call(
        generator_kernel,
        out_shape=jax.ShapeDtypeStruct((target_dim, B), jnp.float32),
        grid=(n_tiles,),
        in_specs=in_specs,
        out_specs=out_spec,
        compiler_params=pltpu.CompilerParams(
            dimension_semantics=("parallel",),   # shard batch tiles over TCs (v7x)
            vmem_limit_bytes=24 * 1024 * 1024,   # safe on v5e/v6e/v7x
        ),
        cost_estimate=cost,
    )(*inputs)

    # Tiny layout plumbing back to torch orientation [B, target]; fuses under jit.
    return out_t.T


# jit so wrapper reshape / transpose fuse and dispatch overhead amortizes.
generator_forward = jax.jit(_generator_forward)


def init_params(key, latent_dim, target_dim):
    """Deterministic synthetic parameters in torch nn.Linear layout
    (weight: [out_features, in_features]; per-feature vectors as [dim, 1])."""
    ks = jax.random.split(key, 6)

    def lin(kw, kb, fan_in, fan_out):
        bound = 1.0 / math.sqrt(fan_in)
        w = jax.random.uniform(kw, (fan_out, fan_in), jnp.float32, -bound, bound)
        b = jax.random.uniform(kb, (fan_out, 1), jnp.float32, -bound, bound)
        return w, b

    w1, b1 = lin(ks[0], ks[1], latent_dim, _H1)
    w2, b2 = lin(ks[2], ks[3], _H1, _H2)
    w3, b3 = lin(ks[4], ks[5], _H2, target_dim)

    return {
        "w1": w1, "b1": b1,
        "g1": jnp.ones((_H1, 1), jnp.float32), "be1": jnp.zeros((_H1, 1), jnp.float32),
        "w2": w2, "b2": b2,
        "g2": jnp.ones((_H2, 1), jnp.float32), "be2": jnp.zeros((_H2, 1), jnp.float32),
        "w3": w3, "b3": b3,
    }


def reference_forward(x, params):
    """Pure-JAX reference of the torch forward (batch-major, f32)."""
    B = x.shape[0]
    h = jnp.reshape(x, (B, -1)).astype(jnp.float32)

    def ln_relu(h, g, be):
        mu = jnp.mean(h, -1, keepdims=True)
        var = jnp.mean((h - mu) ** 2, -1, keepdims=True)
        return jnp.maximum((h - mu) / jnp.sqrt(var + _LN_EPS) * g.T + be.T, 0.0)

    h = h @ params["w1"].T + params["b1"].T
    h = ln_relu(h, params["g1"], params["be1"])
    h = h @ params["w2"].T + params["b2"].T
    h = ln_relu(h, params["g2"], params["be2"])
    h = h @ params["w3"].T + params["b3"].T
    return jax.nn.sigmoid(h)


if __name__ == "__main__":
    key = jax.random.PRNGKey(0)
    k_x, k_p = jax.random.split(key)

    batch, latent_dim, target_dim = 8, 32, 16
    # Input given as [B, 4, 8]; nn.Flatten maps it to [B, 32] (= latent_dim).
    x = jax.random.normal(k_x, (batch, 4, 8), dtype=jnp.float32)

    params = init_params(k_p, latent_dim, target_dim)

    out = generator_forward(x, params)
    out = jax.block_until_ready(out)

    ref = reference_forward(x, params)
    assert out.shape == (batch, target_dim)
    # Tolerance covers MXU f32 multi-pass decomposition vs XLA's reference path.
    assert bool(jnp.max(jnp.abs(out - ref)) < 2e-3)

    print("KERNEL_OK")
</pallas_src>

<mosaic_0001>
module attributes {stable_mosaic.version = 11 : i64} {
  func.func @generator_kernel(%arg0: i32, %arg1: memref<128x32xf32, #tpu.memory_space<vmem>>, %arg2: memref<20x32xf32, #tpu.memory_space<vmem>>, %arg3: memref<20x1xf32, #tpu.memory_space<vmem>>, %arg4: memref<20x1xf32, #tpu.memory_space<vmem>>, %arg5: memref<20x1xf32, #tpu.memory_space<vmem>>, %arg6: memref<10x20xf32, #tpu.memory_space<vmem>>, %arg7: memref<10x1xf32, #tpu.memory_space<vmem>>, %arg8: memref<10x1xf32, #tpu.memory_space<vmem>>, %arg9: memref<10x1xf32, #tpu.memory_space<vmem>>, %arg10: memref<16x10xf32, #tpu.memory_space<vmem>>, %arg11: memref<16x1xf32, #tpu.memory_space<vmem>>, %arg12: memref<16x128xf32, #tpu.memory_space<vmem>>) attributes {dimension_semantics = [#tpu.dimension_semantics<parallel>], iteration_bounds = array<i64: 1>, scalar_prefetch = 0 : i64, scratch_operands = 0 : i64, tpu.core_type = #tpu.core_type<tc>, window_params = [{transform_indices = @transform_0, window_bounds = array<i64: 128, 32>}, {pipeline_mode = #tpu.pipeline_mode<synchronous>, transform_indices = @transform_1, window_bounds = array<i64: 20, 32>}, {pipeline_mode = #tpu.pipeline_mode<synchronous>, transform_indices = @transform_2, window_bounds = array<i64: 20, 1>}, {pipeline_mode = #tpu.pipeline_mode<synchronous>, transform_indices = @transform_3, window_bounds = array<i64: 20, 1>}, {pipeline_mode = #tpu.pipeline_mode<synchronous>, transform_indices = @transform_4, window_bounds = array<i64: 20, 1>}, {pipeline_mode = #tpu.pipeline_mode<synchronous>, transform_indices = @transform_5, window_bounds = array<i64: 10, 20>}, {pipeline_mode = #tpu.pipeline_mode<synchronous>, transform_indices = @transform_6, window_bounds = array<i64: 10, 1>}, {pipeline_mode = #tpu.pipeline_mode<synchronous>, transform_indices = @transform_7, window_bounds = array<i64: 10, 1>}, {pipeline_mode = #tpu.pipeline_mode<synchronous>, transform_indices = @transform_8, window_bounds = array<i64: 10, 1>}, {pipeline_mode = #tpu.pipeline_mode<synchronous>, transform_indices = @transform_9, window_bounds = array<i64: 16, 10>}, {pipeline_mode = #tpu.pipeline_mode<synchronous>, transform_indices = @transform_10, window_bounds = array<i64: 16, 1>}, {transform_indices = @transform_11, window_bounds = array<i64: 16, 128>}]} {
    %c0 = arith.constant 0 : index
    %c0_0 = arith.constant 0 : index
    %0 = vector.load %arg1[%c0, %c0_0] : memref<128x32xf32, #tpu.memory_space<vmem>>, vector<128x32xf32>
    %c0_1 = arith.constant 0 : index
    %c0_2 = arith.constant 0 : index
    %1 = vector.load %arg2[%c0_1, %c0_2] : memref<20x32xf32, #tpu.memory_space<vmem>>, vector<20x32xf32>
    %cst = arith.constant dense<0.000000e+00> : vector<20x128xf32>
    %2 = tpu.matmul %1, %0, %cst {dimension_numbers = #tpu.dot_dimension_numbers<[1], [1], [0], [0], [0, 0, 1, 0], [], []>} : vector<20x32xf32>, vector<128x32xf32>, vector<20x128xf32> -> vector<20x128xf32>
    %c0_3 = arith.constant 0 : index
    %c0_4 = arith.constant 0 : index
    %3 = vector.load %arg3[%c0_3, %c0_4] : memref<20x1xf32, #tpu.memory_space<vmem>>, vector<20x1xf32>
    %4 = vector.broadcast %3 : vector<20x1xf32> to vector<20x128xf32>
    %5 = arith.addf %2, %4 : vector<20x128xf32>
    %cst_5 = arith.constant dense<0.000000e+00> : vector<128xf32>
    %6 = vector.multi_reduction <add>, %5, %cst_5 [0] : vector<20x128xf32> to vector<128xf32>
    %7 = vector.shape_cast %6 : vector<128xf32> to vector<1x128xf32>
    %cst_6 = arith.constant 2.000000e+01 : f32
    %8 = vector.broadcast %cst_6 : f32 to vector<1x128xf32>
    %9 = arith.divf %7, %8 : vector<1x128xf32>
    %10 = vector.broadcast %9 : vector<1x128xf32> to vector<20x128xf32>
    %11 = arith.subf %5, %10 : vector<20x128xf32>
    %12 = arith.mulf %11, %11 : vector<20x128xf32>
    %cst_7 = arith.constant dense<0.000000e+00> : vector<128xf32>
    %13 = vector.multi_reduction <add>, %12, %cst_7 [0] : vector<20x128xf32> to vector<128xf32>
    %14 = vector.shape_cast %13 : vector<128xf32> to vector<1x128xf32>
    %cst_8 = arith.constant 2.000000e+01 : f32
    %15 = vector.broadcast %cst_8 : f32 to vector<1x128xf32>
    %16 = arith.divf %14, %15 : vector<1x128xf32>
    %17 = vector.broadcast %9 : vector<1x128xf32> to vector<20x128xf32>
    %18 = arith.subf %5, %17 : vector<20x128xf32>
    %cst_9 = arith.constant 9.99999974E-6 : f32
    %19 = vector.broadcast %cst_9 : f32 to vector<1x128xf32>
    %20 = arith.addf %16, %19 : vector<1x128xf32>
    %21 = math.rsqrt %20 : vector<1x128xf32>
    %22 = vector.broadcast %21 : vector<1x128xf32> to vector<20x128xf32>
    %23 = arith.mulf %18, %22 : vector<20x128xf32>
    %c0_10 = arith.constant 0 : index
    %c0_11 = arith.constant 0 : index
    %24 = vector.load %arg4[%c0_10, %c0_11] : memref<20x1xf32, #tpu.memory_space<vmem>>, vector<20x1xf32>
    %25 = vector.broadcast %24 : vector<20x1xf32> to vector<20x128xf32>
    %26 = arith.mulf %23, %25 : vector<20x128xf32>
    %c0_12 = arith.constant 0 : index
    %c0_13 = arith.constant 0 : index
    %27 = vector.load %arg5[%c0_12, %c0_13] : memref<20x1xf32, #tpu.memory_space<vmem>>, vector<20x1xf32>
    %28 = vector.broadcast %27 : vector<20x1xf32> to vector<20x128xf32>
    %29 = arith.addf %26, %28 : vector<20x128xf32>
    %cst_14 = arith.constant 0.000000e+00 : f32
    %30 = vector.broadcast %cst_14 : f32 to vector<20x128xf32>
    %31 = arith.maximumf %29, %30 : vector<20x128xf32>
    %c0_15 = arith.constant 0 : index
    %c0_16 = arith.constant 0 : index
    %32 = vector.load %arg6[%c0_15, %c0_16] : memref<10x20xf32, #tpu.memory_space<vmem>>, vector<10x20xf32>
    %cst_17 = arith.constant dense<0.000000e+00> : vector<10x128xf32>
    %33 = tpu.matmul %32, %31, %cst_17 {dimension_numbers = #tpu.dot_dimension_numbers<[1], [0], [0], [1], [0, 0, 1, 1], [], []>} : vector<10x20xf32>, vector<20x128xf32>, vector<10x128xf32> -> vector<10x128xf32>
    %c0_18 = arith.constant 0 : index
    %c0_19 = arith.constant 0 : index
    %34 = vector.load %arg7[%c0_18, %c0_19] : memref<10x1xf32, #tpu.memory_space<vmem>>, vector<10x1xf32>
    %35 = vector.broadcast %34 : vector<10x1xf32> to vector<10x128xf32>
    %36 = arith.addf %33, %35 : vector<10x128xf32>
    %cst_20 = arith.constant dense<0.000000e+00> : vector<128xf32>
    %37 = vector.multi_reduction <add>, %36, %cst_20 [0] : vector<10x128xf32> to vector<128xf32>
    %38 = vector.shape_cast %37 : vector<128xf32> to vector<1x128xf32>
    %cst_21 = arith.constant 1.000000e+01 : f32
    %39 = vector.broadcast %cst_21 : f32 to vector<1x128xf32>
    %40 = arith.divf %38, %39 : vector<1x128xf32>
    %41 = vector.broadcast %40 : vector<1x128xf32> to vector<10x128xf32>
    %42 = arith.subf %36, %41 : vector<10x128xf32>
    %43 = arith.mulf %42, %42 : vector<10x128xf32>
    %cst_22 = arith.constant dense<0.000000e+00> : vector<128xf32>
    %44 = vector.multi_reduction <add>, %43, %cst_22 [0] : vector<10x128xf32> to vector<128xf32>
    %45 = vector.shape_cast %44 : vector<128xf32> to vector<1x128xf32>
    %cst_23 = arith.constant 1.000000e+01 : f32
    %46 = vector.broadcast %cst_23 : f32 to vector<1x128xf32>
    %47 = arith.divf %45, %46 : vector<1x128xf32>
    %48 = vector.broadcast %40 : vector<1x128xf32> to vector<10x128xf32>
    %49 = arith.subf %36, %48 : vector<10x128xf32>
    %cst_24 = arith.constant 9.99999974E-6 : f32
    %50 = vector.broadcast %cst_24 : f32 to vector<1x128xf32>
    %51 = arith.addf %47, %50 : vector<1x128xf32>
    %52 = math.rsqrt %51 : vector<1x128xf32>
    %53 = vector.broadcast %52 : vector<1x128xf32> to vector<10x128xf32>
    %54 = arith.mulf %49, %53 : vector<10x128xf32>
    %c0_25 = arith.constant 0 : index
    %c0_26 = arith.constant 0 : index
    %55 = vector.load %arg8[%c0_25, %c0_26] : memref<10x1xf32, #tpu.memory_space<vmem>>, vector<10x1xf32>
    %56 = vector.broadcast %55 : vector<10x1xf32> to vector<10x128xf32>
    %57 = arith.mulf %54, %56 : vector<10x128xf32>
    %c0_27 = arith.constant 0 : index
    %c0_28 = arith.constant 0 : index
    %58 = vector.load %arg9[%c0_27, %c0_28] : memref<10x1xf32, #tpu.memory_space<vmem>>, vector<10x1xf32>
    %59 = vector.broadcast %58 : vector<10x1xf32> to vector<10x128xf32>
    %60 = arith.addf %57, %59 : vector<10x128xf32>
    %cst_29 = arith.constant 0.000000e+00 : f32
    %61 = vector.broadcast %cst_29 : f32 to vector<10x128xf32>
    %62 = arith.maximumf %60, %61 : vector<10x128xf32>
    %c0_30 = arith.constant 0 : index
    %c0_31 = arith.constant 0 : index
    %63 = vector.load %arg10[%c0_30, %c0_31] : memref<16x10xf32, #tpu.memory_space<vmem>>, vector<16x10xf32>
    %cst_32 = arith.constant dense<0.000000e+00> : vector<16x128xf32>
    %64 = tpu.matmul %63, %62, %cst_32 {dimension_numbers = #tpu.dot_dimension_numbers<[1], [0], [0], [1], [0, 0, 1, 1], [], []>} : vector<16x10xf32>, vector<10x128xf32>, vector<16x128xf32> -> vector<16x128xf32>
    %c0_33 = arith.constant 0 : index
    %c0_34 = arith.constant 0 : index
    %65 = vector.load %arg11[%c0_33, %c0_34] : memref<16x1xf32, #tpu.memory_space<vmem>>, vector<16x1xf32>
    %66 = vector.broadcast %65 : vector<16x1xf32> to vector<16x128xf32>
    %67 = arith.addf %64, %66 : vector<16x128xf32>
    %68 = arith.negf %67 : vector<16x128xf32>
    %69 = math.exp %68 : vector<16x128xf32>
    %cst_35 = arith.constant 1.000000e+00 : f32
    %70 = vector.broadcast %cst_35 : f32 to vector<16x128xf32>
    %71 = arith.addf %70, %69 : vector<16x128xf32>
    %72 = arith.divf %70, %71 : vector<16x128xf32>
    %c0_36 = arith.constant 0 : index
    %c0_37 = arith.constant 0 : index
    %73 = vector.load %arg12[%c0_36, %c0_37] : memref<16x128xf32, #tpu.memory_space<vmem>>, vector<16x128xf32>
    tpu.vector_store %arg12[%c0_36, %c0_37], %72 {strides = array<i32>} : memref<16x128xf32, #tpu.memory_space<vmem>>, vector<16x128xf32>,
    return
  }
  func.func @transform_0(%arg0: i32) -> (i32, i32) {
    %c0_i32 = arith.constant 0 : i32
    %c0_i32_0 = arith.constant 0 : i32
    return %arg0, %c0_i32 : i32, i32
  }
  func.func @transform_1(%arg0: i32) -> (i32, i32) {
    %c0_i32 = arith.constant 0 : i32
    %c0_i32_0 = arith.constant 0 : i32
    %c0_i32_1 = arith.constant 0 : i32
    return %c0_i32, %c0_i32_0 : i32, i32
  }
  func.func @transform_2(%arg0: i32) -> (i32, i32) {
    %c0_i32 = arith.constant 0 : i32
    %c0_i32_0 = arith.constant 0 : i32
    %c0_i32_1 = arith.constant 0 : i32
    return %c0_i32, %c0_i32_0 : i32, i32
  }
  func.func @transform_3(%arg0: i32) -> (i32, i32) {
    %c0_i32 = arith.constant 0 : i32
    %c0_i32_0 = arith.constant 0 : i32
    %c0_i32_1 = arith.constant 0 : i32
    return %c0_i32, %c0_i32_0 : i32, i32
  }
  func.func @transform_4(%arg0: i32) -> (i32, i32) {
    %c0_i32 = arith.constant 0 : i32
    %c0_i32_0 = arith.constant 0 : i32
    %c0_i32_1 = arith.constant 0 : i32
    return %c0_i32, %c0_i32_0 : i32, i32
  }
  func.func @transform_5(%arg0: i32) -> (i32, i32) {
    %c0_i32 = arith.constant 0 : i32
    %c0_i32_0 = arith.constant 0 : i32
    %c0_i32_1 = arith.constant 0 : i32
    return %c0_i32, %c0_i32_0 : i32, i32
  }
  func.func @transform_6(%arg0: i32) -> (i32, i32) {
    %c0_i32 = arith.constant 0 : i32
    %c0_i32_0 = arith.constant 0 : i32
    %c0_i32_1 = arith.constant 0 : i32
    return %c0_i32, %c0_i32_0 : i32, i32
  }
  func.func @transform_7(%arg0: i32) -> (i32, i32) {
    %c0_i32 = arith.constant 0 : i32
    %c0_i32_0 = arith.constant 0 : i32
    %c0_i32_1 = arith.constant 0 : i32
    return %c0_i32, %c0_i32_0 : i32, i32
  }
  func.func @transform_8(%arg0: i32) -> (i32, i32) {
    %c0_i32 = arith.constant 0 : i32
    %c0_i32_0 = arith.constant 0 : i32
    %c0_i32_1 = arith.constant 0 : i32
    return %c0_i32, %c0_i32_0 : i32, i32
  }
  func.func @transform_9(%arg0: i32) -> (i32, i32) {
    %c0_i32 = arith.constant 0 : i32
    %c0_i32_0 = arith.constant 0 : i32
    %c0_i32_1 = arith.constant 0 : i32
    return %c0_i32, %c0_i32_0 : i32, i32
  }
  func.func @transform_10(%arg0: i32) -> (i32, i32) {
    %c0_i32 = arith.constant 0 : i32
    %c0_i32_0 = arith.constant 0 : i32
    %c0_i32_1 = arith.constant 0 : i32
    return %c0_i32, %c0_i32_0 : i32, i32
  }
  func.func @transform_11(%arg0: i32) -> (i32, i32) {
    %c0_i32 = arith.constant 0 : i32
    %c0_i32_0 = arith.constant 0 : i32
    return %c0_i32, %arg0 : i32, i32
  }
}

</mosaic_0001>

<llo_original>
// kernel: _generator_forward.1
$region0: #{_generator_forward.1}
  #allocation0 [shape = 'u32[]', space=smem, size = 0x4, offset = 0x4, fixed_abs, tag = 'smem constant byte address 0x4 - core index']
  #allocation1 [shape = 'u32[144,128]{1,0:T(1,128)}', space=vmem, size = 0x12000, scoped, tag = 'internal scratch']
  %s0 = inlined_call_operand.vmem [shape: f32[8,32], index: 0, kind: input, shape index: {}]
  %s1 = inlined_call_operand.vmem [shape: f32[20,32], index: 1, kind: input, shape index: {}]
  %s2 = inlined_call_operand.vmem [shape: f32[20,1], index: 2, kind: input, shape index: {}]
  %s3 = inlined_call_operand.vmem [shape: f32[20,1], index: 3, kind: input, shape index: {}]
  %s4 = inlined_call_operand.vmem [shape: f32[20,1], index: 4, kind: input, shape index: {}]
  %s5 = inlined_call_operand.vmem [shape: f32[10,20], index: 5, kind: input, shape index: {}]
  %s6 = inlined_call_operand.vmem [shape: f32[10,1], index: 6, kind: input, shape index: {}]
  %s7 = inlined_call_operand.vmem [shape: f32[10,1], index: 7, kind: input, shape index: {}]
  %s8 = inlined_call_operand.vmem [shape: f32[10,1], index: 8, kind: input, shape index: {}]
  %s9 = inlined_call_operand.vmem [shape: f32[16,10], index: 9, kind: input, shape index: {}]
  %s10 = inlined_call_operand.vmem [shape: f32[16,1], index: 10, kind: input, shape index: {}]
  %s11 = inlined_call_operand.vmem [shape: f32[16,8], index: 11, kind: output, shape index: {}]
  %s12 = sld [smem:[#allocation0]]
  $region54: #{_generator_forward.1} parent=0
    _
  %s14 = ssub.s32 1, %s12
  %s15 = scalar_select 0, %s14, %s12
  // Predicated region
  $region2: #{_generator_forward.1} parent=0 // pred_check
    _
  $region3: #{_generator_forward.1} parent=0 // pred_check_branch
    %17 = sbr.rel (0) target = $region5
  $region4: #{_generator_forward.1} parent=0 // pred_region
    _
  $region5: #{_generator_forward.1} parent=0 // pred_fallthru
    _
  // Predicated region
  $region6: #{_generator_forward.1} parent=0 // pred_check
    _
  $region7: #{_generator_forward.1} parent=0 // pred_check_branch
    %19 = sbr.rel (0) target = $region9
  $region8: #{_generator_forward.1} parent=0 // pred_region
    _
  $region9: #{_generator_forward.1} parent=0 // pred_fallthru
    _
  // Predicated region
  $region10: #{_generator_forward.1} parent=0 // pred_check
    _
  $region11: #{_generator_forward.1} parent=0 // pred_check_branch
    %21 = sbr.rel (0) target = $region13
  $region12: #{_generator_forward.1} parent=0 // pred_region
    _
  $region13: #{_generator_forward.1} parent=0 // pred_fallthru
    _
  // Predicated region
  $region14: #{_generator_forward.1} parent=0 // pred_check
    _
  $region15: #{_generator_forward.1} parent=0 // pred_check_branch
    %23 = sbr.rel (0) target = $region17
  $region16: #{_generator_forward.1} parent=0 // pred_region
    _
  $region17: #{_generator_forward.1} parent=0 // pred_fallthru
    _
  // Predicated region
  $region18: #{_generator_forward.1} parent=0 // pred_check
    _
  $region19: #{_generator_forward.1} parent=0 // pred_check_branch
    %25 = sbr.rel (0) target = $region21
  $region20: #{_generator_forward.1} parent=0 // pred_region
    _
  $region21: #{_generator_forward.1} parent=0 // pred_fallthru
    _
  // Predicated region
  $region22: #{_generator_forward.1} parent=0 // pred_check
    _
  $region23: #{_generator_forward.1} parent=0 // pred_check_branch
    %27 = sbr.rel (0) target = $region25
  $region24: #{_generator_forward.1} parent=0 // pred_region
    _
  $region25: #{_generator_forward.1} parent=0 // pred_fallthru
    _
  // Predicated region
  $region26: #{_generator_forward.1} parent=0 // pred_check
    _
  $region27: #{_generator_forward.1} parent=0 // pred_check_branch
    %29 = sbr.rel (0) target = $region29
  $region28: #{_generator_forward.1} parent=0 // pred_region
    _
  $region29: #{_generator_forward.1} parent=0 // pred_fallthru
    _
  // Predicated region
  $region30: #{_generator_forward.1} parent=0 // pred_check
    _
  $region31: #{_generator_forward.1} parent=0 // pred_check_branch
    %31 = sbr.rel (0) target = $region33
  $region32: #{_generator_forward.1} parent=0 // pred_region
    _
  $region33: #{_generator_forward.1} parent=0 // pred_fallthru
    _
  // Predicated region
  $region34: #{_generator_forward.1} parent=0 // pred_check
    _
  $region35: #{_generator_forward.1} parent=0 // pred_check_branch
    %33 = sbr.rel (0) target = $region37
  $region36: #{_generator_forward.1} parent=0 // pred_region
    _
  $region37: #{_generator_forward.1} parent=0 // pred_fallthru
    _
  // Predicated region
  $region38: #{_generator_forward.1} parent=0 // pred_check
    _
  $region39: #{_generator_forward.1} parent=0 // pred_check_branch
    %35 = sbr.rel (0) target = $region41
  $region40: #{_generator_forward.1} parent=0 // pred_region
    _
  $region41: #{_generator_forward.1} parent=0 // pred_fallthru
    _
  // Predicated region
  $region42: #{_generator_forward.1} parent=0 // pred_check
    _
  $region43: #{_generator_forward.1} parent=0 // pred_check_branch
    %37 = sbr.rel (0) target = $region45
  $region44: #{_generator_forward.1} parent=0 // pred_region
    _
  $region45: #{_generator_forward.1} parent=0 // pred_fallthru
    _
  %v38 = vld [vmem:[%s0] sm:$0xff]
  %v39 = vld [vmem:[%s0 + $0x8] sm:$0xff]
  %v40 = vld [vmem:[%s0 + $0x10] sm:$0xff]
  %v41 = vld [vmem:[%s0 + $0x18] sm:$0xff]
  %v42 = vld [vmem:[%s0 + $0x20] sm:$0xff]
  %v43 = vld [vmem:[%s0 + $0x28] sm:$0xff]
  %v44 = vld [vmem:[%s0 + $0x30] sm:$0xff]
  %v45 = vld [vmem:[%s0 + $0x38] sm:$0xff]
  %v46 = vld [vmem:[%s0 + $0x40] sm:$0xff]
  %v47 = vld [vmem:[%s0 + $0x48] sm:$0xff]
  %v48 = vld [vmem:[%s0 + $0x50] sm:$0xff]
  %v49 = vld [vmem:[%s0 + $0x58] sm:$0xff]
  %v50 = vld [vmem:[%s0 + $0x60] sm:$0xff]
  %v51 = vld [vmem:[%s0 + $0x68] sm:$0xff]
  %v52 = vld [vmem:[%s0 + $0x70] sm:$0xff]
  %v53 = vld [vmem:[%s0 + $0x78] sm:$0xff]
  %v54 = vld [vmem:[%s1] sm:$0xff]
  %v55 = vld [vmem:[%s1 + $0x8] sm:$0xff]
  %v56 = vld [vmem:[%s1 + $0x10] sm:$0xf]
  %v57 = vld [vmem:[%s2] sm:$0xff]
  %v58 = vld [vmem:[%s2 + $0x8] sm:$0xff]
  %v59 = vld [vmem:[%s2 + $0x10] sm:$0xf]
  %61 = vset.pattern.permute.xlu0 0
  %62 = vperm.xlu0 %61, %v57
  %v63 = vpop.permute.xlu0 %62
  %66 = vset.pattern.permute.xlu0 0
  %67 = vperm.xlu0 %66, %v58
  %v68 = vpop.permute.xlu0 %67
  %71 = vset.pattern.permute.xlu0 0
  %72 = vperm.xlu0 %71, %v59
  %v73 = vpop.permute.xlu0 %72
  %vm75 = vcmask 261120
  %v77 = vsel %vm75, %v54, 0
  %v80 = vsel %vm75, %v55, 0
  %v83 = vsel %vm75, %v56, 0
  %v86 = vsel %vm75, %v38, 0
  %v89 = vsel %vm75, %v39, 0
  %v92 = vsel %vm75, %v40, 0
  %v95 = vsel %vm75, %v41, 0
  %v98 = vsel %vm75, %v42, 0
  %v101 = vsel %vm75, %v43, 0
  %v104 = vsel %vm75, %v44, 0
  %v107 = vsel %vm75, %v45, 0
  %v110 = vsel %vm75, %v46, 0
  %v113 = vsel %vm75, %v47, 0
  %v116 = vsel %vm75, %v48, 0
  %v119 = vsel %vm75, %v49, 0
  %v122 = vsel %vm75, %v50, 0
  %v125 = vsel %vm75, %v51, 0
  %v128 = vsel %vm75, %v52, 0
  %v131 = vsel %vm75, %v53, 0
  %133 = vmatprep.subr.mxu0 0.0
  %134 = vmatpush1.xpose.msra.mxu0 %v131
  %135 = vmatprep.subr.mxu0 0.0
  %136 = vmatpush1.xpose.msra.mxu0 %v128
  %137 = vmatprep.subr.mxu0 0.0
  %138 = vmatpush1.xpose.msra.mxu0 %v125
  %139 = vmatprep.subr.mxu0 0.0
  %140 = vmatpush1.xpose.msra.mxu0 %v122
  %141 = vmatprep.subr.mxu0 0.0
  %142 = vmatpush1.xpose.msra.mxu0 %v119
  %143 = vmatprep.subr.mxu0 0.0
  %144 = vmatpush1.xpose.msra.mxu0 %v116
  %145 = vmatprep.subr.mxu0 0.0
  %146 = vmatpush1.xpose.msra.mxu0 %v113
  %147 = vmatprep.subr.mxu0 0.0
  %148 = vmatpush1.xpose.msra.mxu0 %v110
  %149 = vmatprep.subr.mxu0 0.0
  %150 = vmatpush1.xpose.msra.mxu0 %v107
  %151 = vmatprep.subr.mxu0 0.0
  %152 = vmatpush1.xpose.msra.mxu0 %v104
  %153 = vmatprep.subr.mxu0 0.0
  %154 = vmatpush1.xpose.msra.mxu0 %v101
  %155 = vmatprep.subr.mxu0 0.0
  %156 = vmatpush1.xpose.msra.mxu0 %v98
  %157 = vmatprep.subr.mxu0 0.0
  %158 = vmatpush1.xpose.msra.mxu0 %v95
  %159 = vmatprep.subr.mxu0 0.0
  %160 = vmatpush1.xpose.msra.mxu0 %v92
  %161 = vmatprep.subr.mxu0 0.0
  %162 = vmatpush1.xpose.msra.mxu0 %v89
  %163 = vmatprep.subr.mxu0 0.0
  %164 = vmatpush1.xpose.msra.mxu0 %v86
  %165 = vmatprep.subr.mxu0 0.0
  %166 = vmatpush2.xpose.msra.mxu0 0.0
  %167 = vmatprep.subr.mxu0 0.0
  %168 = vmatpush2.xpose.msra.mxu0 0.0
  %169 = vmatprep.subr.mxu0 0.0
  %170 = vmatpush2.xpose.msra.mxu0 0.0
  %171 = vmatprep.subr.mxu0 0.0
  %172 = vmatpush2.xpose.msra.mxu0 0.0
  %173 = vmatprep.subr.mxu0 0.0
  %174 = vmatpush2.xpose.msra.mxu0 0.0
  %175 = vmatprep.subr.mxu0 0.0
  %176 = vmatpush2.xpose.msra.mxu0 0.0
  %177 = vmatprep.subr.mxu0 0.0
  %178 = vmatpush2.xpose.msra.mxu0 0.0
  %179 = vmatprep.subr.mxu0 0.0
  %180 = vmatpush2.xpose.msra.mxu0 0.0
  %181 = vmatprep.subr.mxu0 0.0
  %182 = vmatpush2.xpose.msra.mxu0 0.0
  %183 = vmatprep.subr.mxu0 0.0
  %184 = vmatpush2.xpose.msra.mxu0 0.0
  %185 = vmatprep.subr.mxu0 0.0
  %186 = vmatpush2.xpose.msra.mxu0 0.0
  %187 = vmatprep.subr.mxu0 0.0
  %188 = vmatpush2.xpose.msra.mxu0 0.0
  %189 = vmatprep.subr.mxu0 0.0
  %190 = vmatpush2.xpose.msra.mxu0 0.0
  %191 = vmatprep.subr.mxu0 0.0
  %192 = vmatpush2.xpose.msra.mxu0 0.0
  %193 = vmatprep.subr.mxu0 0.0
  %194 = vmatpush2.xpose.msra.mxu0 0.0
  %195 = vmatprep.subr.mxu0 0.0
  %196 = vmatpush2.xpose.msra.mxu0 0.0
  %197 = vmatprep.mubr.f32.mxu0 0.0
  %198 = vmatmul.mubr.f32.gmra.mxu0 %v77
  %v199 = vpop.f32.mrf.mxu0
  %v200 = vadd.f32 %v63, %v199
  %v201 = vpop.f32.mrf.mxu0
  %202 = vmatprep.mubr.f32.mxu0 0.0
  %203 = vmatmul.mubr.f32.gmra.mxu0 %v80
  %v204 = vpop.f32.mrf.mxu0
  %v205 = vadd.f32 %v68, %v204
  %v206 = vpop.f32.mrf.mxu0
  %207 = vmatprep.mubr.f32.mxu0 0.0
  %208 = vmatmul.mubr.f32.gmra.mxu0 %v83
  %v209 = vpop.f32.mrf.mxu0
  %v210 = vadd.f32 %v73, %v209
  %v211 = vpop.f32.mrf.mxu0
  %212 = vdwg.mxu0
  %v213 = vadd.f32 %v200, %v205
  %vm214 = vcmask 1043456
  %v215 = vsel %vm214, %v210, 0.0
  %v216 = vadd.f32 %v213, %v215
  %v217 = vrot.slane %v216, 4
  %v218 = vadd.f32 %v216, %v217
  %v219 = vrot.slane %v218, 2
  %v220 = vadd.f32 %v218, %v219
  %v221 = vrot.slane %v220, 1
  %v222 = vadd.f32 %v220, %v221
  %v223 = vrcp.pop 20.0
  %v224 = vmul.f32 %v222, %v223
  %v225 = vsub.f32 %v200, %v224
  %v226 = vsub.f32 %v205, %v224
  %v227 = vsub.f32 %v210, %v224
  %v228 = vmul.f32 %v225, %v225
  %v229 = vmul.f32 %v226, %v226
  %v230 = vmul.f32 %v227, %v227
  %v231 = vadd.f32 %v228, %v229
  %v232 = vsel %vm214, %v230, 0.0
  %v233 = vadd.f32 %v231, %v232
  %v234 = vrot.slane %v233, 4
  %v235 = vadd.f32 %v233, %v234
  %v236 = vrot.slane %v235, 2
  %v237 = vadd.f32 %v235, %v236
  %v238 = vrot.slane %v237, 1
  %v239 = vadd.f32 %v237, %v238
  %v240 = vmul.f32 %v239, %v223
  %v241 = vadd.f32 %v240, 1e-05
  %v242 = vrsqrt.pop %v241
  %v243 = vmul.f32 %v225, %v242
  %v244 = vmul.f32 %v226, %v242
  %v245 = vmul.f32 %v227, %v242
  %v246 = vld [vmem:[%s3] sm:$0xff]
  %v247 = vld [vmem:[%s3 + $0x8] sm:$0xff]
  %v248 = vld [vmem:[%s3 + $0x10] sm:$0xf]
  %250 = vset.pattern.permute.xlu0 0
  %251 = vperm.xlu0 %250, %v246
  %v252 = vpop.permute.xlu0 %251
  %255 = vset.pattern.permute.xlu0 0
  %256 = vperm.xlu0 %255, %v247
  %v257 = vpop.permute.xlu0 %256
  %260 = vset.pattern.permute.xlu0 0
  %261 = vperm.xlu0 %260, %v248
  %v262 = vpop.permute.xlu0 %261
  %v264 = vmul.f32 %v243, %v252
  %v265 = vmul.f32 %v244, %v257
  %v266 = vmul.f32 %v245, %v262
  %v267 = vld [vmem:[%s4] sm:$0xff]
  %v268 = vld [vmem:[%s4 + $0x8] sm:$0xff]
  %v269 = vld [vmem:[%s4 + $0x10] sm:$0xf]
  %271 = vset.pattern.permute.xlu0 0
  %272 = vperm.xlu0 %271, %v267
  %v273 = vpop.permute.xlu0 %272
  %276 = vset.pattern.permute.xlu0 0
  %277 = vperm.xlu0 %276, %v268
  %v278 = vpop.permute.xlu0 %277
  %281 = vset.pattern.permute.xlu0 0
  %282 = vperm.xlu0 %281, %v269
  %v283 = vpop.permute.xlu0 %282
  %v285 = vadd.f32 %v264, %v273
  %v286 = vadd.f32 %v265, %v278
  %v287 = vadd.f32 %v266, %v283
  %v288 = vmax.f32 %v285, 0.0
  %v289 = vmax.f32 %v286, 0.0
  %v290 = vmax.f32 %v287, 0.0
  %v291 = vld [vmem:[%s5] sm:$0xff]
  %v292 = vld [vmem:[%s5 + $0x8] sm:$0x3]
  %v293 = vld [vmem:[%s6] sm:$0xff]
  %v294 = vld [vmem:[%s6 + $0x8] sm:$0x3]
  %296 = vset.pattern.permute.xlu0 0
  %297 = vperm.xlu0 %296, %v293
  %v298 = vpop.permute.xlu0 %297
  %301 = vset.pattern.permute.xlu0 0
  %302 = vperm.xlu0 %301, %v294
  %v303 = vpop.permute.xlu0 %302
  %vm305 = vcmask 162816
  %v307 = vsel %vm305, %v291, 0
  %v310 = vsel %vm305, %v292, 0
  %v313 = vsel %vm214, %v290, 0
  %315 = vmatprep.subr.mxu0 0.0
  %316 = vmatpush1.msra.mxu0 0.0
  %317 = vmatprep.subr.mxu0 0.0
  %318 = vmatpush1.msra.mxu0 0.0
  %319 = vmatprep.subr.mxu0 0.0
  %320 = vmatpush1.msra.mxu0 0.0
  %321 = vmatprep.subr.mxu0 0.0
  %322 = vmatpush1.msra.mxu0 0.0
  %323 = vmatprep.subr.mxu0 0.0
  %324 = vmatpush1.msra.mxu0 0.0
  %325 = vmatprep.subr.mxu0 0.0
  %326 = vmatpush1.msra.mxu0 0.0
  %327 = vmatprep.subr.mxu0 0.0
  %328 = vmatpush1.msra.mxu0 0.0
  %329 = vmatprep.subr.mxu0 0.0
  %330 = vmatpush1.msra.mxu0 0.0
  %331 = vmatprep.subr.mxu0 0.0
  %332 = vmatpush1.msra.mxu0 0.0
  %333 = vmatprep.subr.mxu0 0.0
  %334 = vmatpush1.msra.mxu0 0.0
  %335 = vmatprep.subr.mxu0 0.0
  %336 = vmatpush1.msra.mxu0 0.0
  %337 = vmatprep.subr.mxu0 0.0
  %338 = vmatpush1.msra.mxu0 0.0
  %339 = vmatprep.subr.mxu0 0.0
  %340 = vmatpush1.msra.mxu0 0.0
  %341 = vmatprep.subr.mxu0 0.0
  %342 = vmatpush1.msra.mxu0 %v313
  %343 = vmatprep.subr.mxu0 0.0
  %344 = vmatpush1.msra.mxu0 %v289
  %345 = vmatprep.subr.mxu0 0.0
  %346 = vmatpush1.msra.mxu0 %v288
  %347 = vmatprep.subr.mxu0 0.0
  %348 = vmatpush2.msra.mxu0 0.0
  %349 = vmatprep.subr.mxu0 0.0
  %350 = vmatpush2.msra.mxu0 0.0
  %351 = vmatprep.subr.mxu0 0.0
  %352 = vmatpush2.msra.mxu0 0.0
  %353 = vmatprep.subr.mxu0 0.0
  %354 = vmatpush2.msra.mxu0 0.0
  %355 = vmatprep.subr.mxu0 0.0
  %356 = vmatpush2.msra.mxu0 0.0
  %357 = vmatprep.subr.mxu0 0.0
  %358 = vmatpush2.msra.mxu0 0.0
  %359 = vmatprep.subr.mxu0 0.0
  %360 = vmatpush2.msra.mxu0 0.0
  %361 = vmatprep.subr.mxu0 0.0
  %362 = vmatpush2.msra.mxu0 0.0
  %363 = vmatprep.subr.mxu0 0.0
  %364 = vmatpush2.msra.mxu0 0.0
  %365 = vmatprep.subr.mxu0 0.0
  %366 = vmatpush2.msra.mxu0 0.0
  %367 = vmatprep.subr.mxu0 0.0
  %368 = vmatpush2.msra.mxu0 0.0
  %369 = vmatprep.subr.mxu0 0.0
  %370 = vmatpush2.msra.mxu0 0.0
  %371 = vmatprep.subr.mxu0 0.0
  %372 = vmatpush2.msra.mxu0 0.0
  %373 = vmatprep.subr.mxu0 0.0
  %374 = vmatpush2.msra.mxu0 0.0
  %375 = vmatprep.subr.mxu0 0.0
  %376 = vmatpush2.msra.mxu0 0.0
  %377 = vmatprep.subr.mxu0 0.0
  %378 = vmatpush2.msra.mxu0 0.0
  %379 = vmatprep.mubr.f32.mxu0 0.0
  %380 = vmatmul.mubr.f32.gmra.mxu0 %v307
  %v381 = vpop.f32.mrf.mxu0
  %v382 = vadd.f32 %v298, %v381
  %v383 = vpop.f32.mrf.mxu0
  %384 = vmatprep.mubr.f32.mxu0 0.0
  %385 = vmatmul.mubr.f32.gmra.mxu0 %v310
  %v386 = vpop.f32.mrf.mxu0
  %v387 = vadd.f32 %v303, %v386
  %v388 = vpop.f32.mrf.mxu0
  %389 = vdwg.mxu0
  %vm390 = vcmask 1041408
  %v391 = vsel %vm390, %v387, 0.0
  %v392 = vadd.f32 %v382, %v391
  %v393 = vrot.slane %v392, 4
  %v394 = vadd.f32 %v392, %v393
  %v395 = vrot.slane %v394, 2
  %v396 = vadd.f32 %v394, %v395
  %v397 = vrot.slane %v396, 1
  %v398 = vadd.f32 %v396, %v397
  %v399 = vrcp.pop 10.0
  %v400 = vmul.f32 %v398, %v399
  %v401 = vsub.f32 %v382, %v400
  %v402 = vsub.f32 %v387, %v400
  %v403 = vmul.f32 %v401, %v401
  %v404 = vmul.f32 %v402, %v402
  %v405 = vsel %vm390, %v404, 0.0
  %v406 = vadd.f32 %v403, %v405
  %v407 = vrot.slane %v406, 4
  %v408 = vadd.f32 %v406, %v407
  %v409 = vrot.slane %v408, 2
  %v410 = vadd.f32 %v408, %v409
  %v411 = vrot.slane %v410, 1
  %v412 = vadd.f32 %v410, %v411
  %v413 = vmul.f32 %v412, %v399
  %v414 = vadd.f32 %v413, 1e-05
  %v415 = vrsqrt.pop %v414
  %v416 = vmul.f32 %v401, %v415
  %v417 = vmul.f32 %v402, %v415
  %v418 = vld [vmem:[%s7] sm:$0xff]
  %v419 = vld [vmem:[%s7 + $0x8] sm:$0x3]
  %421 = vset.pattern.permute.xlu0 0
  %422 = vperm.xlu0 %421, %v418
  %v423 = vpop.permute.xlu0 %422
  %426 = vset.pattern.permute.xlu0 0
  %427 = vperm.xlu0 %426, %v419
  %v428 = vpop.permute.xlu0 %427
  %v430 = vmul.f32 %v416, %v423
  %v431 = vmul.f32 %v417, %v428
  %v432 = vld [vmem:[%s8] sm:$0xff]
  %v433 = vld [vmem:[%s8 + $0x8] sm:$0x3]
  %435 = vset.pattern.permute.xlu0 0
  %436 = vperm.xlu0 %435, %v432
  %v437 = vpop.permute.xlu0 %436
  %440 = vset.pattern.permute.xlu0 0
  %441 = vperm.xlu0 %440, %v433
  %v442 = vpop.permute.xlu0 %441
  %v444 = vadd.f32 %v430, %v437
  %v445 = vadd.f32 %v431, %v442
  %v446 = vmax.f32 %v444, 0.0
  %v447 = vmax.f32 %v445, 0.0
  %v448 = vld [vmem:[%s9] sm:$0xff]
  %v449 = vld [vmem:[%s9 + $0x8] sm:$0xff]
  %v450 = vld [vmem:[%s10] sm:$0xff]
  %v451 = vld [vmem:[%s10 + $0x8] sm:$0xff]
  %453 = vset.pattern.permute.xlu0 0
  %454 = vperm.xlu0 %453, %v450
  %v455 = vpop.permute.xlu0 %454
  %458 = vset.pattern.permute.xlu0 0
  %459 = vperm.xlu0 %458, %v451
  %v460 = vpop.permute.xlu0 %459
  %vm462 = vcmask 80896
  %v464 = vsel %vm462, %v448, 0
  %v467 = vsel %vm462, %v449, 0
  %v470 = vsel %vm390, %v447, 0
  %472 = vmatprep.subr.mxu0 0.0
  %473 = vmatpush1.msra.mxu0 0.0
  %474 = vmatprep.subr.mxu0 0.0
  %475 = vmatpush1.msra.mxu0 0.0
  %476 = vmatprep.subr.mxu0 0.0
  %477 = vmatpush1.msra.mxu0 0.0
  %478 = vmatprep.subr.mxu0 0.0
  %479 = vmatpush1.msra.mxu0 0.0
  %480 = vmatprep.subr.mxu0 0.0
  %481 = vmatpush1.msra.mxu0 0.0
  %482 = vmatprep.subr.mxu0 0.0
  %483 = vmatpush1.msra.mxu0 0.0
  %484 = vmatprep.subr.mxu0 0.0
  %485 = vmatpush1.msra.mxu0 0.0
  %486 = vmatprep.subr.mxu0 0.0
  %487 = vmatpush1.msra.mxu0 0.0
  %488 = vmatprep.subr.mxu0 0.0
  %489 = vmatpush1.msra.mxu0 0.0
  %490 = vmatprep.subr.mxu0 0.0
  %491 = vmatpush1.msra.mxu0 0.0
  %492 = vmatprep.subr.mxu0 0.0
  %493 = vmatpush1.msra.mxu0 0.0
  %494 = vmatprep.subr.mxu0 0.0
  %495 = vmatpush1.msra.mxu0 0.0
  %496 = vmatprep.subr.mxu0 0.0
  %497 = vmatpush1.msra.mxu0 0.0
  %498 = vmatprep.subr.mxu0 0.0
  %499 = vmatpush1.msra.mxu0 0.0
  %500 = vmatprep.subr.mxu0 0.0
  %501 = vmatpush1.msra.mxu0 %v470
  %502 = vmatprep.subr.mxu0 0.0
  %503 = vmatpush1.msra.mxu0 %v446
  %504 = vmatprep.subr.mxu0 0.0
  %505 = vmatpush2.msra.mxu0 0.0
  %506 = vmatprep.subr.mxu0 0.0
  %507 = vmatpush2.msra.mxu0 0.0
  %508 = vmatprep.subr.mxu0 0.0
  %509 = vmatpush2.msra.mxu0 0.0
  %510 = vmatprep.subr.mxu0 0.0
  %511 = vmatpush2.msra.mxu0 0.0
  %512 = vmatprep.subr.mxu0 0.0
  %513 = vmatpush2.msra.mxu0 0.0
  %514 = vmatprep.subr.mxu0 0.0
  %515 = vmatpush2.msra.mxu0 0.0
  %516 = vmatprep.subr.mxu0 0.0
  %517 = vmatpush2.msra.mxu0 0.0
  %518 = vmatprep.subr.mxu0 0.0
  %519 = vmatpush2.msra.mxu0 0.0
  %520 = vmatprep.subr.mxu0 0.0
  %521 = vmatpush2.msra.mxu0 0.0
  %522 = vmatprep.subr.mxu0 0.0
  %523 = vmatpush2.msra.mxu0 0.0
  %524 = vmatprep.subr.mxu0 0.0
  %525 = vmatpush2.msra.mxu0 0.0
  %526 = vmatprep.subr.mxu0 0.0
  %527 = vmatpush2.msra.mxu0 0.0
  %528 = vmatprep.subr.mxu0 0.0
  %529 = vmatpush2.msra.mxu0 0.0
  %530 = vmatprep.subr.mxu0 0.0
  %531 = vmatpush2.msra.mxu0 0.0
  %532 = vmatprep.subr.mxu0 0.0
  %533 = vmatpush2.msra.mxu0 0.0
  %534 = vmatprep.subr.mxu0 0.0
  %535 = vmatpush2.msra.mxu0 0.0
  %536 = vmatprep.mubr.f32.mxu0 0.0
  %537 = vmatmul.mubr.f32.gmra.mxu0 %v464
  %v538 = vpop.f32.mrf.mxu0
  %v539 = vadd.f32 %v455, %v538
  %v540 = vpop.f32.mrf.mxu0
  %541 = vmatprep.mubr.f32.mxu0 0.0
  %542 = vmatmul.mubr.f32.gmra.mxu0 %v467
  %v543 = vpop.f32.mrf.mxu0
  %v544 = vadd.f32 %v460, %v543
  %v545 = vpop.f32.mrf.mxu0
  %546 = vdwg.mxu0
  %v547 = vxor.u32 %v539, 2147483648
  %v548 = vxor.u32 %v544, 2147483648
  %v549 = vmul.f32 %v547, 1.442695
  %v550 = vpow.pop %v549
  %v551 = vmul.f32 %v548, 1.442695
  %v552 = vpow.pop %v551
  %v553 = vadd.f32 %v550, 1.0
  %v554 = vadd.f32 %v552, 1.0
  %v555 = vrcp.pop %v553
  %v556 = vmul.f32 1.0, %v555
  %v557 = vrcp.pop %v554
  %v558 = vmul.f32 1.0, %v557
  %559 = vst [vmem:[%s11] sm:$0xff] %v556
  %560 = vst [vmem:[%s11 + $0x8] sm:$0xff] %v558
  // Predicated region
  $region46: #{_generator_forward.1} parent=0 // pred_check
    _
  $region47: #{_generator_forward.1} parent=0 // pred_check_branch
    %562 = sbr.rel (0) target = $region49
  $region48: #{_generator_forward.1} parent=0 // pred_region
    _
  $region49: #{_generator_forward.1} parent=0 // pred_fallthru
    _
  // Predicated region
  $region50: #{_generator_forward.1} parent=0 // pred_check
    _
  $region51: #{_generator_forward.1} parent=0 // pred_check_branch
    %564 = sbr.rel (0) target = $region53
  $region52: #{_generator_forward.1} parent=0 // pred_region
    _
  $region53: #{_generator_forward.1} parent=0 // pred_fallthru
    _

</llo_original>
